<compile_context>
chip_gen: v5e
topology: v5e:2x2
jax: 0.10.0
libtpu: 0.0.40
codegen_flags: <defaults>
</compile_context>

<pallas_src>
import functools

import jax
import jax.numpy as jnp
from jax.experimental import pallas as pl
from jax.experimental.pallas import tpu as pltpu

_LANE = 128      # vreg lane width
_SUBLANE = 8     # f32 sublane granule


def _linreg_kernel(w_ref, b_ref, x_ref, o_ref):
    # w_ref: (1, 2) f32 SMEM, b_ref: (1, 1) f32 SMEM
    # x_ref: (2, rows_blk, 128) f32 VMEM  (feature plane, batch rows, lanes)
    # o_ref: (rows_blk, 128)    f32 VMEM  (fully dense output tile)
    w0 = w_ref[0, 0]
    w1 = w_ref[0, 1]
    bias = b_ref[0, 0]
    x0 = x_ref[0]                            # (rows_blk, 128)
    x1 = x_ref[1]                            # (rows_blk, 128)
    o_ref[...] = x0 * w0 + x1 * w1 + bias    # pure VPU FMA, dense vst


@functools.partial(jax.jit, static_argnames=("target_rows",))
def linear_regression_forward(x, w, b, *, target_rows=8192):
    """x: (N, 2) f32, w: (1, 2) f32, b: (1, 1) f32 -> (N, 1) f32."""
    n, k = x.shape
    assert k == 2, "LinearRegression expects 2 input features"

    # Lane-rows needed for the batch, aligned to the 8-sublane granule.
    m = pl.cdiv(n, _LANE)
    m8 = max(_SUBLANE, pl.cdiv(m, _SUBLANE) * _SUBLANE)

    # Grid steps: big enough tiles to amortize per-step overhead, but keep
    # >= 2 steps (v7x megacore) whenever the batch can be split.
    g = max(1, pl.cdiv(m8, target_rows))
    if g == 1 and m8 >= 2 * _SUBLANE:
        g = 2
    rows_blk = pl.cdiv(pl.cdiv(m8, g), _SUBLANE) * _SUBLANE
    g = pl.cdiv(m8, rows_blk)
    m_pad = g * rows_blk
    n_pad = m_pad * _LANE

    # Single layout pass (fused under jit): (N,2) -> padded (2, n_pad),
    # then a free contiguous reshape to the dense (2, m_pad, 128) view.
    xt = x.astype(jnp.float32).T                       # (2, N)
    if n_pad != n:
        xt = jnp.pad(xt, ((0, 0), (0, n_pad - n)))     # zero rows, masked out below
    xt = xt.reshape(2, m_pad, _LANE)

    out = pl.pallas_call(
        _linreg_kernel,
        out_shape=jax.ShapeDtypeStruct((m_pad, _LANE), jnp.float32),
        grid=(g,),
        in_specs=[
            pl.BlockSpec(memory_space=pltpu.MemorySpace.SMEM),      # w (1, 2)
            pl.BlockSpec(memory_space=pltpu.MemorySpace.SMEM),      # b (1, 1)
            pl.BlockSpec((2, rows_blk, _LANE), lambda i: (0, i, 0)),  # x tile
        ],
        out_specs=pl.BlockSpec((rows_blk, _LANE), lambda i: (i, 0)),
        compiler_params=pltpu.CompilerParams(
            dimension_semantics=("parallel",),
            vmem_limit_bytes=48 * 1024 * 1024,   # safe on v5e/v6e/v7x
        ),
    )(w.astype(jnp.float32), b.astype(jnp.float32), xt)

    # Free contiguous reshape; trailing slice drops batch padding.
    return out.reshape(-1)[:n].reshape(n, 1)


def _reference(x, w, b):
    # Algebraically identical to x @ w.T + b, kept on the elementwise f32
    # path so the check does not depend on XLA's matmul precision.
    return x[:, 0:1] * w[0, 0] + x[:, 1:2] * w[0, 1] + b[0, 0]


if __name__ == "__main__":
    key = jax.random.PRNGKey(0)
    k_w, k_x1, k_x2 = jax.random.split(key, 3)

    # Parameters matching the module's __init__ shapes:
    #   self.w = randn_like(Tensor(w0)) -> (1, 2); self.b = zeros_like(b0) -> (1, 1)
    w = jax.random.normal(k_w, (1, 2), dtype=jnp.float32)
    b = jnp.zeros((1, 1), dtype=jnp.float32)

    # Small batch consistent with forward(): x @ w.T needs x: (N, 2).
    x_small = jax.random.normal(k_x1, (8, 2), dtype=jnp.float32)
    out_small = jax.block_until_ready(linear_regression_forward(x_small, w, b))
    assert out_small.shape == (8, 1)
    assert jnp.allclose(out_small, _reference(x_small, w, b), atol=1e-5, rtol=1e-5)

    # Second check: non-multiple-of-128 batch, nonzero bias, multi-step grid path.
    b2 = jnp.full((1, 1), 10.0, dtype=jnp.float32)
    x_big = jax.random.normal(k_x2, (200, 2), dtype=jnp.float32)
    out_big = jax.block_until_ready(
        linear_regression_forward(x_big, w, b2, target_rows=8)
    )
    assert out_big.shape == (200, 1)
    assert jnp.allclose(out_big, _reference(x_big, w, b2), atol=1e-5, rtol=1e-5)

    print("KERNEL_OK")
</pallas_src>

<mosaic_0001>
module attributes {stable_mosaic.version = 11 : i64} {
  func.func @_linreg_kernel(%arg0: i32, %arg1: memref<1x2xf32, #tpu.memory_space<smem>>, %arg2: memref<1x1xf32, #tpu.memory_space<smem>>, %arg3: memref<2x8x128xf32, #tpu.memory_space<vmem>>, %arg4: memref<8x128xf32, #tpu.memory_space<vmem>>) attributes {dimension_semantics = [#tpu.dimension_semantics<parallel>], iteration_bounds = array<i64: 1>, scalar_prefetch = 0 : i64, scratch_operands = 0 : i64, tpu.core_type = #tpu.core_type<tc>, window_params = [{transform_indices = @transform_0, window_bounds = array<i64: 1, 2>}, {transform_indices = @transform_1, window_bounds = array<i64: 1, 1>}, {transform_indices = @transform_2, window_bounds = array<i64: 2, 8, 128>}, {transform_indices = @transform_3, window_bounds = array<i64: 8, 128>}]} {
    %c0 = arith.constant 0 : index
    %c0_0 = arith.constant 0 : index
    %0 = memref.load %arg1[%c0, %c0_0] : memref<1x2xf32, #tpu.memory_space<smem>>
    %c0_1 = arith.constant 0 : index
    %c1 = arith.constant 1 : index
    %1 = memref.load %arg1[%c0_1, %c1] : memref<1x2xf32, #tpu.memory_space<smem>>
    %c0_2 = arith.constant 0 : index
    %c0_3 = arith.constant 0 : index
    %2 = memref.load %arg2[%c0_2, %c0_3] : memref<1x1xf32, #tpu.memory_space<smem>>
    %c0_4 = arith.constant 0 : index
    %c0_5 = arith.constant 0 : index
    %c0_6 = arith.constant 0 : index
    %3 = vector.load %arg3[%c0_4, %c0_5, %c0_6] : memref<2x8x128xf32, #tpu.memory_space<vmem>>, vector<1x8x128xf32>
    %4 = vector.shape_cast %3 : vector<1x8x128xf32> to vector<8x128xf32>
    %c1_7 = arith.constant 1 : index
    %c0_8 = arith.constant 0 : index
    %c0_9 = arith.constant 0 : index
    %5 = vector.load %arg3[%c1_7, %c0_8, %c0_9] : memref<2x8x128xf32, #tpu.memory_space<vmem>>, vector<1x8x128xf32>
    %6 = vector.shape_cast %5 : vector<1x8x128xf32> to vector<8x128xf32>
    %7 = vector.broadcast %0 : f32 to vector<8x128xf32>
    %8 = arith.mulf %4, %7 : vector<8x128xf32>
    %9 = vector.broadcast %1 : f32 to vector<8x128xf32>
    %10 = arith.mulf %6, %9 : vector<8x128xf32>
    %11 = arith.addf %8, %10 : vector<8x128xf32>
    %12 = vector.broadcast %2 : f32 to vector<8x128xf32>
    %13 = arith.addf %11, %12 : vector<8x128xf32>
    %c0_10 = arith.constant 0 : index
    %c0_11 = arith.constant 0 : index
    %14 = vector.load %arg4[%c0_10, %c0_11] : memref<8x128xf32, #tpu.memory_space<vmem>>, vector<8x128xf32>
    tpu.vector_store %arg4[%c0_10, %c0_11], %13 {strides = array<i32>} : memref<8x128xf32, #tpu.memory_space<vmem>>, vector<8x128xf32>,
    return
  }
  func.func @transform_0(%arg0: i32) -> (i32, i32) {
    %c0_i32 = arith.constant 0 : i32
    %c0_i32_0 = arith.constant 0 : i32
    %c0_i32_1 = arith.constant 0 : i32
    return %c0_i32, %c0_i32_0 : i32, i32
  }
  func.func @transform_1(%arg0: i32) -> (i32, i32) {
    %c0_i32 = arith.constant 0 : i32
    %c0_i32_0 = arith.constant 0 : i32
    %c0_i32_1 = arith.constant 0 : i32
    return %c0_i32, %c0_i32_0 : i32, i32
  }
  func.func @transform_2(%arg0: i32) -> (i32, i32, i32) {
    %c0_i32 = arith.constant 0 : i32
    %c0_i32_0 = arith.constant 0 : i32
    %c0_i32_1 = arith.constant 0 : i32
    return %c0_i32, %arg0, %c0_i32_0 : i32, i32, i32
  }
  func.func @transform_3(%arg0: i32) -> (i32, i32) {
    %c0_i32 = arith.constant 0 : i32
    %c0_i32_0 = arith.constant 0 : i32
    return %arg0, %c0_i32 : i32, i32
  }
}

</mosaic_0001>

<llo_original>
// kernel: linear_regression_forward.1
$region0: #{linear_regression_forward.1}
  #allocation0 [shape = 'u32[]', space=smem, size = 0x4, offset = 0x4, fixed_abs, tag = 'smem constant byte address 0x4 - core index']
  #allocation1 [shape = 'u32[72,128]{1,0:T(1,128)}', space=vmem, size = 0x9000, scoped, tag = 'internal scratch']
  #allocation2 [shape = 'f32[1,1]{1,0:T(1,128)S(6)}', space=smem, size = 0x200, scoped, tag = 'scoped memory for linear_regression_forward.1']
  %s0 = inlined_call_operand.vmem [shape: f32[1,2], index: 0, kind: input, shape index: {}]
  %s1 = inlined_call_operand.<no memory space> [shape: f32[1,1], index: 1, kind: input, shape index: {}]
  %s2 = inlined_call_operand.vmem [shape: f32[2,8,128], index: 2, kind: input, shape index: {}]
  %s3 = inlined_call_operand.vmem [shape: f32[8,128], index: 3, kind: output, shape index: {}]
  %s4 = sld [smem:[#allocation0]]
  $region26: #{linear_regression_forward.1} parent=0
    _
  %s6 = ssub.s32 1, %s4
  %s7 = scalar_select 0, %s6, %s4
  %8 = sst [smem:[#allocation2]] %s1
  $region1: #{linear_regression_forward.1} parent=0
    #allocation3 [shape = 'u8[512]{0}', space=smem, size = 0x200, scoped, tag = 'input window, operand 0, single buffered']
    #allocation4 [shape = 's32[1]{0}', space=sflag, size = 0x4, scoped, tag = 'scoped memory for linear_regression_forward.1']
    %9 = vsyncpa [#allocation4], 0
    // Predicated region
    $region2: #{linear_regression_forward.1} parent=1 // pred_check
      _
    $region3: #{linear_regression_forward.1} parent=1 // pred_check_branch
      %11 = sbr.rel (0) target = $region5
    $region4: #{linear_regression_forward.1} parent=1 // pred_region
      %13 = vsyncadd [#allocation4], 0
      %s15 = sshll.u32 %s0, 4
      %s16 = int_to_ptr.vmem [resolvable:$true] %s15
      %18 = dma.vmem_to_smem %s16, 16, [#allocation3], [#allocation4]
    $region5: #{linear_regression_forward.1} parent=1 // pred_fallthru
      _
    // Predicated region
    $region6: #{linear_regression_forward.1} parent=1 // pred_check
      _
    $region7: #{linear_regression_forward.1} parent=1 // pred_check_branch
      %20 = sbr.rel (0) target = $region9
    $region8: #{linear_regression_forward.1} parent=1 // pred_region
      _
    $region9: #{linear_regression_forward.1} parent=1 // pred_fallthru
      _
    // Predicated region
    $region10: #{linear_regression_forward.1} parent=1 // pred_check
      _
    $region11: #{linear_regression_forward.1} parent=1 // pred_check_branch
      %22 = sbr.rel (0) target = $region13
    $region12: #{linear_regression_forward.1} parent=1 // pred_region
      _
    $region13: #{linear_regression_forward.1} parent=1 // pred_fallthru
      _
    // Predicated region
    $region14: #{linear_regression_forward.1} parent=1 // pred_check
      _
    $region15: #{linear_regression_forward.1} parent=1 // pred_check_branch
      %24 = sbr.rel (0) target = $region17
    $region16: #{linear_regression_forward.1} parent=1 // pred_region
      %26 = dma.done [#allocation4], 16
    $region17: #{linear_regression_forward.1} parent=1 // pred_fallthru
      _
    %27 = sfence
    %s28 = sld [smem:[#allocation3]]
    %s29 = sld [smem:[#allocation3 + $0x1]]
    %s30 = sld [smem:[#allocation2]]
    %v31 = vld [vmem:[%s2] sm:$0xff]
    %s32 = scalar_lea.vmem %s2, 8
    %v33 = vld [vmem:[%s32] sm:$0xff]
    %v34 = vstv %s28
    %v35 = vmul.f32 %v31, %v34
    %v36 = vstv %s29
    %v37 = vmul.f32 %v33, %v36
    %v38 = vadd.f32 %v35, %v37
    %v39 = vstv %s30
    %v40 = vadd.f32 %v38, %v39
    %41 = vst [vmem:[%s3] sm:$0xff] %v40
    // Predicated region
    $region18: #{linear_regression_forward.1} parent=1 // pred_check
      _
    $region19: #{linear_regression_forward.1} parent=1 // pred_check_branch
      %43 = sbr.rel (0) target = $region21
    $region20: #{linear_regression_forward.1} parent=1 // pred_region
      _
    $region21: #{linear_regression_forward.1} parent=1 // pred_fallthru
      _
    // Predicated region
    $region22: #{linear_regression_forward.1} parent=1 // pred_check
      _
    $region23: #{linear_regression_forward.1} parent=1 // pred_check_branch
      %45 = sbr.rel (0) target = $region25
    $region24: #{linear_regression_forward.1} parent=1 // pred_region
      _
    $region25: #{linear_regression_forward.1} parent=1 // pred_fallthru
      _
    %46 = vsyncpa [#allocation4], 1

</llo_original>
